<compile_context>
chip_gen: v5e
topology: v5e:2x2
jax: 0.10.0
libtpu: 0.0.40
codegen_flags: <defaults>
</compile_context>

<pallas_src>
import jax
import jax.numpy as jnp
from jax.experimental import pallas as pl
from jax.experimental.pallas import tpu as pltpu


# --------------------------------------------------------------------------
# Kernel 1: PLM body on the stacked streams.
#   h = tanh(e @ W1 + b1), e = [merged ; share] stacked along M  (bf16 in, bf16 out,
#   f32 accumulation).  Tiled (M, N, K) grid with accumulator scratch.
# --------------------------------------------------------------------------
def hidden_kernel(e_ref, w1_ref, b1_ref, h_ref, acc_ref):
    k = pl.program_id(2)

    @pl.when(k == 0)
    def _():
        acc_ref[...] = jnp.zeros_like(acc_ref)

    acc_ref[...] += jnp.dot(
        e_ref[...], w1_ref[...], preferred_element_type=jnp.float32
    )

    @pl.when(k == pl.num_programs(2) - 1)
    def _():
        h_ref[...] = jnp.tanh(acc_ref[...] + b1_ref[...]).astype(h_ref.dtype)


def hidden_pass(e, w1, b1, *, tm=128, tn=128, tk=128):
    m, kk = e.shape
    n = w1.shape[1]
    grid = (m // tm, n // tn, kk // tk)
    return pl.pallas_call(
        hidden_kernel,
        out_shape=jax.ShapeDtypeStruct((m, n), jnp.bfloat16),
        grid_spec=pltpu.PrefetchScalarGridSpec(
            num_scalar_prefetch=0,
            grid=grid,
            in_specs=[
                pl.BlockSpec((tm, tk), lambda i, j, k: (i, k)),
                pl.BlockSpec((tk, tn), lambda i, j, k: (k, j)),
                pl.BlockSpec((1, tn), lambda i, j, k: (0, j)),
            ],
            out_specs=pl.BlockSpec((tm, tn), lambda i, j, k: (i, j)),
            scratch_shapes=[pltpu.VMEM((tm, tn), jnp.float32)],
        ),
        compiler_params=pltpu.CompilerParams(
            dimension_semantics=("parallel", "parallel", "arbitrary")
        ),
    )(e, w1, b1)


# --------------------------------------------------------------------------
# Kernel 2: fused LM head + verbalizer on the masked rows only.
#   logits_tile = h_masked @ Wv[:, tile] + bv[tile]                  (MXU, f32 acc)
#   online logsumexp over vocab tiles (m/s scratch)
#   out[:, l]  += logits at column word_ids[l] (in-kernel iota==id selector matmul)
#   finalize: out = out - (m + log s)   == log_softmax gathered at the word ids
# Output is one lane-dense [Mp, 128] slab; label / issue columns are sliced in the
# wrapper.  The [B, S, V] logits tensor never exists.
# --------------------------------------------------------------------------
def head_verbalizer_kernel(ids_ref, h_ref, wv_ref, bv_ref, out_ref, m_sc, s_sc):
    j = pl.program_id(0)
    tv = wv_ref.shape[1]

    @pl.when(j == 0)
    def _():
        m_sc[...] = jnp.full_like(m_sc, -jnp.inf)
        s_sc[...] = jnp.zeros_like(s_sc)
        out_ref[...] = jnp.zeros_like(out_ref)

    logits = (
        jnp.dot(h_ref[...], wv_ref[...], preferred_element_type=jnp.float32)
        + bv_ref[...]
    )  # [Mp, tv] f32

    # online logsumexp over the vocab axis
    m_prev = m_sc[...]
    m_new = jnp.maximum(m_prev, jnp.max(logits, axis=-1, keepdims=True))
    s_sc[...] = s_sc[...] * jnp.exp(m_prev - m_new) + jnp.sum(
        jnp.exp(logits - m_new), axis=-1, keepdims=True
    )
    m_sc[...] = m_new

    # gather the packed label/issue word-id columns of the raw logits (no one-hot
    # operand in HBM: build the selector from an iota compare inside the kernel)
    local_ids = ids_ref[...] - j * tv                       # [1, 128] int32
    iota_v = jax.lax.broadcasted_iota(jnp.int32, (tv, 128), 0)
    sel = (iota_v == local_ids).astype(jnp.float32)         # [tv, 128]
    out_ref[...] += jnp.dot(logits, sel, preferred_element_type=jnp.float32)

    @pl.when(j == pl.num_programs(0) - 1)
    def _():
        out_ref[...] = out_ref[...] - (m_sc[...] + jnp.log(s_sc[...]))


def head_verbalize(ids, h_masked, wv, bv, *, tv=256):
    mp, h = h_masked.shape
    v = wv.shape[1]
    grid = (v // tv,)
    return pl.pallas_call(
        head_verbalizer_kernel,
        out_shape=jax.ShapeDtypeStruct((mp, 128), jnp.float32),
        grid_spec=pltpu.PrefetchScalarGridSpec(
            num_scalar_prefetch=0,
            grid=grid,
            in_specs=[
                pl.BlockSpec((1, 128), lambda j: (0, 0)),
                pl.BlockSpec((mp, h), lambda j: (0, 0)),
                pl.BlockSpec((h, tv), lambda j: (0, j)),
                pl.BlockSpec((1, tv), lambda j: (0, j)),
            ],
            out_specs=pl.BlockSpec((mp, 128), lambda j: (0, 0)),
            scratch_shapes=[
                pltpu.VMEM((mp, 1), jnp.float32),
                pltpu.VMEM((mp, 1), jnp.float32),
            ],
        ),
        compiler_params=pltpu.CompilerParams(dimension_semantics=("arbitrary",)),
    )(ids, h_masked, wv, bv)


# --------------------------------------------------------------------------
# Glue: params, template substitution, and the PromptForMergedGoal.forward
# orchestration.
# --------------------------------------------------------------------------
def init_params(key, vocab, hidden, n_soft, issues=("0",)):
    ks = jax.random.split(key, 6 + len(issues))
    params = {
        "word_emb": (jax.random.normal(ks[0], (vocab, hidden), jnp.float32) * 0.02
                     ).astype(jnp.bfloat16),
        "soft_share": (jax.random.normal(ks[1], (n_soft, hidden), jnp.float32) * 0.02
                       ).astype(jnp.bfloat16),
        "w1": (jax.random.normal(ks[2], (hidden, hidden), jnp.float32)
               / jnp.sqrt(hidden)).astype(jnp.bfloat16),
        "b1": jax.random.normal(ks[3], (1, hidden), jnp.float32) * 0.1,
        "wv": (jax.random.normal(ks[4], (hidden, vocab), jnp.float32)
               / jnp.sqrt(hidden)).astype(jnp.bfloat16),
        "bv": jax.random.normal(ks[5], (1, vocab), jnp.float32) * 0.1,
    }
    for i, issue in enumerate(issues):
        params["soft_" + issue] = (
            jax.random.normal(ks[6 + i], (n_soft, hidden), jnp.float32) * 0.02
        ).astype(jnp.bfloat16)
    return params


def _with_soft(base, soft, n_soft):
    # PtuningTemplate.process_batch: word embeddings with the first n_soft positions
    # replaced by trainable soft-prompt embeddings.  (Embedding gather is glue.)
    s = base.shape[1]
    h = base.shape[2]
    soft_full = jnp.concatenate(
        [soft, jnp.zeros((s - n_soft, h), soft.dtype)], axis=0
    )
    soft_mask = (jnp.arange(s) < n_soft)[None, :, None]
    return jnp.where(soft_mask, soft_full[None], base)


def prompt_for_merged_goal_forward(
    params, batch, issue, label_word_ids, issue_word_ids,
    *, tm=128, tn=128, tk=128, tv=256,
):
    # TODO(synk): plm / Template / Verbalizer are abstract in the reference; a
    # tanh-MLP LM head, soft-prompt substitution and log-softmax + label-word gather
    # are their concrete synthetic instantiations here.
    input_ids = batch["input_ids"]
    loss_ids = batch["loss_ids"]
    b, s = input_ids.shape
    h = params["w1"].shape[0]
    n_soft = params["soft_share"].shape[0]

    base = params["word_emb"][input_ids]                    # [B, S, H] bf16

    # merged = (issue_embeds + share_embeds)/2 : the streams differ only in the soft
    # rows, so average the soft prompts once and build a single merged-embed tensor
    # (no two-input merge inside the kernel -> half the PLM input DMA).
    soft_merged = (
        (params["soft_" + issue].astype(jnp.float32)
         + params["soft_share"].astype(jnp.float32)) * 0.5
    ).astype(base.dtype)
    merged_embeds = _with_soft(base, soft_merged, n_soft)            # plm(**input_batch)
    share_embeds = _with_soft(base, params["soft_share"], n_soft)    # plm(**share_batch)

    # stack both PLM calls along M so the weights stream from HBM once
    e_stack = jnp.concatenate([merged_embeds, share_embeds], axis=0).reshape(
        2 * b * s, h
    )

    # PLM body: hidden states for every position (tiled kernel 1)
    hid = hidden_pass(e_stack, params["w1"], params["b1"], tm=tm, tn=tn, tk=tk)

    # extract_at_mask BEFORE the vocab head (one loss_id per example).
    # TODO(synk): multi-mask-per-example extract_at_mask (outputs.view(B,-1,V)) is
    # not supported by this single-mask fast path.
    mask_pos = jnp.argmax(loss_ids, axis=-1)                # [B]
    rows = jnp.concatenate(
        [jnp.arange(b) * s + mask_pos, b * s + jnp.arange(b) * s + mask_pos]
    )                                                       # [2B] merged rows then share rows
    mp = max(8, ((2 * b + 7) // 8) * 8)
    h_masked = jnp.zeros((mp, h), hid.dtype).at[: 2 * b].set(hid[rows])

    # pack verbalizer label-word ids into one lane-dense (1, 128) id vector
    n_lab = int(label_word_ids.shape[0])
    n_iss = int(issue_word_ids.shape[0])
    ids = jnp.zeros((1, 128), jnp.int32)
    ids = ids.at[0, :n_lab].set(label_word_ids)
    ids = ids.at[0, n_lab:n_lab + n_iss].set(issue_word_ids)

    # fused LM head + log-softmax + label-word gather (kernel 2)
    packed = head_verbalize(ids, h_masked, params["wv"], params["bv"], tv=tv)

    label_words_logits = packed[:b, :n_lab]                 # merged stream, label words
    issue_logits = packed[b:2 * b, n_lab:n_lab + n_iss]     # share stream, issue words
    return label_words_logits, issue_logits


# --------------------------------------------------------------------------
# Pure-JAX reference (un-fused dataflow of the original module) for validation.
# --------------------------------------------------------------------------
def reference_forward(params, batch, issue, label_word_ids, issue_word_ids):
    input_ids = batch["input_ids"]
    loss_ids = batch["loss_ids"]
    b, s = input_ids.shape
    h = params["w1"].shape[0]
    n_soft = params["soft_share"].shape[0]

    base = params["word_emb"][input_ids]
    issue_e = _with_soft(base, params["soft_" + issue], n_soft).astype(jnp.float32)
    share_e = _with_soft(base, params["soft_share"], n_soft).astype(jnp.float32)
    merged_e = (issue_e + share_e) * 0.5

    def plm(e):
        eb = e.astype(jnp.bfloat16).reshape(b * s, h)
        hid = jnp.tanh(
            jnp.dot(eb, params["w1"], preferred_element_type=jnp.float32)
            + params["b1"]
        ).astype(jnp.bfloat16)
        return (
            jnp.dot(hid, params["wv"], preferred_element_type=jnp.float32)
            + params["bv"]
        ).reshape(b, s, -1)

    logits = plm(merged_e)
    issue_logits_full = plm(share_e)
    pos = jnp.argmax(loss_ids, axis=-1)
    ext = logits[jnp.arange(b), pos]
    ext_i = issue_logits_full[jnp.arange(b), pos]
    return (
        jax.nn.log_softmax(ext, axis=-1)[:, label_word_ids],
        jax.nn.log_softmax(ext_i, axis=-1)[:, issue_word_ids],
    )


if __name__ == "__main__":
    B, S, V, H, N_SOFT = 2, 128, 512, 256, 4
    L_LABEL, L_ISSUE = 3, 4

    key = jax.random.PRNGKey(0)
    k_params, k_ids, k_mask = jax.random.split(key, 3)
    params = init_params(k_params, V, H, N_SOFT, issues=("0",))

    input_ids = jax.random.randint(k_ids, (B, S), 0, V, dtype=jnp.int32)
    # exactly one <mask> per example (OpenPrompt single-mask case)
    mask_pos = jax.random.randint(k_mask, (B,), N_SOFT, S, dtype=jnp.int32)
    loss_ids = (jnp.arange(S)[None, :] == mask_pos[:, None]).astype(jnp.int32)
    batch = {"input_ids": input_ids, "loss_ids": loss_ids}

    label_word_ids = jnp.array([3, 7, 11], jnp.int32)
    issue_word_ids = jnp.array([1, 5, 9, 13], jnp.int32)

    label_words_logits, issue_logits = prompt_for_merged_goal_forward(
        params, batch, "0", label_word_ids, issue_word_ids
    )
    jax.block_until_ready((label_words_logits, issue_logits))
    assert label_words_logits.shape == (B, L_LABEL)
    assert issue_logits.shape == (B, L_ISSUE)

    ref_label, ref_issue = reference_forward(
        params, batch, "0", label_word_ids, issue_word_ids
    )
    assert bool(jnp.allclose(label_words_logits, ref_label, atol=1e-2, rtol=1e-2))
    assert bool(jnp.allclose(issue_logits, ref_issue, atol=1e-2, rtol=1e-2))
    print("KERNEL_OK")
</pallas_src>

<mosaic_0001>
module attributes {stable_mosaic.version = 11 : i64} {
  func.func @hidden_kernel(%arg0: i32, %arg1: i32, %arg2: i32, %arg3: memref<128x128xbf16, #tpu.memory_space<vmem>>, %arg4: memref<128x128xbf16, #tpu.memory_space<vmem>>, %arg5: memref<1x128xf32, #tpu.memory_space<vmem>>, %arg6: memref<128x128xbf16, #tpu.memory_space<vmem>>, %arg7: memref<128x128xf32, #tpu.memory_space<vmem>>) attributes {dimension_semantics = [#tpu.dimension_semantics<parallel>, #tpu.dimension_semantics<parallel>, #tpu.dimension_semantics<arbitrary>], iteration_bounds = array<i64: 4, 2, 2>, scalar_prefetch = 0 : i64, scratch_operands = 1 : i64, tpu.core_type = #tpu.core_type<tc>, window_params = [{transform_indices = @transform_0, window_bounds = array<i64: 128, 128>}, {transform_indices = @transform_1, window_bounds = array<i64: 128, 128>}, {transform_indices = @transform_2, window_bounds = array<i64: 1, 128>}, {transform_indices = @transform_3, window_bounds = array<i64: 128, 128>}]} {
    %c0_i32 = arith.constant 0 : i32
    %0 = arith.cmpi eq, %arg2, %c0_i32 : i32
    %1 = arith.extui %0 : i1 to i32
    %c0_i32_0 = arith.constant 0 : i32
    %2 = arith.cmpi ne, %1, %c0_i32_0 : i32
    scf.if %2 {
      %cst_9 = arith.constant 0.000000e+00 : f32
      %12 = vector.broadcast %cst_9 : f32 to vector<128x128xf32>
      %c0_10 = arith.constant 0 : index
      %c0_11 = arith.constant 0 : index
      %13 = vector.load %arg7[%c0_10, %c0_11] : memref<128x128xf32, #tpu.memory_space<vmem>>, vector<128x128xf32>
      tpu.vector_store %arg7[%c0_10, %c0_11], %12 {strides = array<i32>} : memref<128x128xf32, #tpu.memory_space<vmem>>, vector<128x128xf32>,
    } else {
    }
    %c0 = arith.constant 0 : index
    %c0_1 = arith.constant 0 : index
    %3 = vector.load %arg7[%c0, %c0_1] : memref<128x128xf32, #tpu.memory_space<vmem>>, vector<128x128xf32>
    %c0_2 = arith.constant 0 : index
    %c0_3 = arith.constant 0 : index
    %4 = vector.load %arg3[%c0_2, %c0_3] : memref<128x128xbf16, #tpu.memory_space<vmem>>, vector<128x128xbf16>
    %c0_4 = arith.constant 0 : index
    %c0_5 = arith.constant 0 : index
    %5 = vector.load %arg4[%c0_4, %c0_5] : memref<128x128xbf16, #tpu.memory_space<vmem>>, vector<128x128xbf16>
    %cst = arith.constant dense<0.000000e+00> : vector<128x128xf32>
    %6 = tpu.matmul %4, %5, %cst {dimension_numbers = #tpu.dot_dimension_numbers<[1], [0], [0], [1], [0, 0, 1, 1], [], []>} : vector<128x128xbf16>, vector<128x128xbf16>, vector<128x128xf32> -> vector<128x128xf32>
    %7 = arith.addf %3, %6 : vector<128x128xf32>
    %c0_6 = arith.constant 0 : index
    %c0_7 = arith.constant 0 : index
    %8 = vector.load %arg7[%c0_6, %c0_7] : memref<128x128xf32, #tpu.memory_space<vmem>>, vector<128x128xf32>
    tpu.vector_store %arg7[%c0_6, %c0_7], %7 {strides = array<i32>} : memref<128x128xf32, #tpu.memory_space<vmem>>, vector<128x128xf32>,
    %c1_i32 = arith.constant 1 : i32
    %9 = arith.cmpi eq, %arg2, %c1_i32 : i32
    %10 = arith.extui %9 : i1 to i32
    %c0_i32_8 = arith.constant 0 : i32
    %11 = arith.cmpi ne, %10, %c0_i32_8 : i32
    scf.if %11 {
      %c0_9 = arith.constant 0 : index
      %c0_10 = arith.constant 0 : index
      %12 = vector.load %arg7[%c0_9, %c0_10] : memref<128x128xf32, #tpu.memory_space<vmem>>, vector<128x128xf32>
      %c0_11 = arith.constant 0 : index
      %c0_12 = arith.constant 0 : index
      %13 = vector.load %arg5[%c0_11, %c0_12] : memref<1x128xf32, #tpu.memory_space<vmem>>, vector<1x128xf32>
      %14 = vector.broadcast %13 : vector<1x128xf32> to vector<128x128xf32>
      %15 = arith.addf %12, %14 : vector<128x128xf32>
      %16 = math.tanh %15 : vector<128x128xf32>
      %17 = arith.truncf %16 : vector<128x128xf32> to vector<128x128xbf16>
      %c0_13 = arith.constant 0 : index
      %c0_14 = arith.constant 0 : index
      %18 = vector.load %arg6[%c0_13, %c0_14] : memref<128x128xbf16, #tpu.memory_space<vmem>>, vector<128x128xbf16>
      tpu.vector_store %arg6[%c0_13, %c0_14], %17 {strides = array<i32>} : memref<128x128xbf16, #tpu.memory_space<vmem>>, vector<128x128xbf16>,
    } else {
    }
    return
  }
  func.func @transform_0(%arg0: i32, %arg1: i32, %arg2: i32) -> (i32, i32) {
    %c0_i32 = arith.constant 0 : i32
    return %arg0, %arg2 : i32, i32
  }
  func.func @transform_1(%arg0: i32, %arg1: i32, %arg2: i32) -> (i32, i32) {
    %c0_i32 = arith.constant 0 : i32
    return %arg2, %arg1 : i32, i32
  }
  func.func @transform_2(%arg0: i32, %arg1: i32, %arg2: i32) -> (i32, i32) {
    %c0_i32 = arith.constant 0 : i32
    %c0_i32_0 = arith.constant 0 : i32
    return %c0_i32, %arg1 : i32, i32
  }
  func.func @transform_3(%arg0: i32, %arg1: i32, %arg2: i32) -> (i32, i32) {
    %c0_i32 = arith.constant 0 : i32
    return %arg0, %arg1 : i32, i32
  }
}

</mosaic_0001>

<llo_original>
// kernel: tpu_custom_call.1
$region0: #{tpu_custom_call.1}
  #allocation0 [shape = 'u32[]', space=smem, size = 0x4, offset = 0x4, fixed_abs, tag = 'smem constant byte address 0x4 - core index']
  #allocation1 [shape = 'u32[72,128]{1,0:T(1,128)}', space=vmem, size = 0x9000, scoped, tag = 'internal scratch']
  #allocation2 [shape = 'f32[128,128]{1,0:T(8,128)}', space=vmem, size = 0x10000, scoped, tag = 'scratch operand']
  %s0 = inlined_call_operand.hbm [shape: bf16[512,256], index: 0, kind: input, shape index: {}]
  %s1 = inlined_call_operand.hbm [shape: bf16[256,256], index: 1, kind: input, shape index: {}]
  %s2 = inlined_call_operand.hbm [shape: f32[1,256], index: 2, kind: input, shape index: {}]
  %s3 = inlined_call_operand.hbm [shape: bf16[512,256], index: 3, kind: output, shape index: {}]
  %s4 = sld [smem:[#allocation0]]
  $region65: #{tpu_custom_call.1} parent=0
    _
  %s6 = ssub.s32 1, %s4
  %s7 = scalar_select 0, %s6, %s4
  $region1: #{tpu_custom_call.1} parent=0
    #allocation3 [shape = 'u8[65536]{0}', space=vmem, size = 0x10000, scoped, tag = 'input window, operand 0']
    #allocation4 [shape = 's32[2]{0}', space=sflag, size = 0x8, scoped, tag = 'scoped memory for tpu_custom_call.1']
    #allocation5 [shape = 's32[2]{0}', space=sflag, size = 0x8, scoped, tag = 'scoped memory for tpu_custom_call.1']
    #allocation6 [shape = 'u8[65536]{0}', space=vmem, size = 0x10000, scoped, tag = 'input window, operand 1']
    #allocation7 [shape = 's32[2]{0}', space=sflag, size = 0x8, scoped, tag = 'scoped memory for tpu_custom_call.1']
    #allocation8 [shape = 'u8[1024]{0}', space=vmem, size = 0x400, scoped, tag = 'input window, operand 2']
    #allocation9 [shape = 'u8[65536]{0}', space=vmem, size = 0x10000, scoped, tag = 'output window, operand 0']
    %8 = vsyncpa [#allocation4], 0
    %s9 = scalar_lea.sflag [#allocation4], 1
    %10 = vsyncpa %s9, 0
    %11 = vsyncpa [#allocation7], 0
    %s12 = scalar_lea.sflag [#allocation7], 1
    %13 = vsyncpa %s12, 0
    %14 = vsyncpa [#allocation5], 0
    %s15 = scalar_lea.sflag [#allocation5], 1
    %16 = vsyncpa %s15, 0
    loop: start=0, step=1, limit=18
    $region2: #{tpu_custom_call.1} parent=1 // loop_pre_header
      _
    $region3: #{tpu_custom_call.1} parent=1 // loop_header
      %s18 = sphi 0, %s22
      %p19 = scmp.ge.s32.totalorder %s18, 18
      %s25 = sphi 0, %s44
      %s26 = sphi 0, %s40
      %s27 = sphi 0, %s36
      %s28 = sphi 0, %s25
      %s29 = sphi 0, %s26
      %s30 = sphi 0, %s27
      %s31 = sphi 0, %s28
      %s32 = sphi 0, %s29
      %s33 = sphi 0, %s30
      %s49 = sphi 0, %s51
      %s52 = sphi 0, %s49
      %s53 = sphi 0, %s52
      %s69 = sphi 0, %s53
      %s77 = sphi 0, %s79
      %s80 = sphi 0, %s77
      %s81 = sphi 0, %s80
      %s97 = sphi 0, %s81
      %s103 = sphi 0, %s105
      %s106 = sphi 0, %s103
      %s107 = sphi 0, %s106
      %s123 = sphi 0, %s107
      %s131 = sphi 0, %s133
      %s134 = sphi 0, %s131
      %s135 = sphi 0, %s134
      %s151 = sphi 0, %s135
    $region4: #{tpu_custom_call.1} parent=1 // loop_header_branch
      %21 = sbr.rel (%p19) target = $region8
    $region5: #{tpu_custom_call.1} parent=1 // loop_body
      %s23 = ssub.s32 %s18, 1
      %s24 = ssub.s32 %s18, 2
      %s34 = sadd.s32 1, %s27
      %p35 = scmp.ge.s32.totalorder %s34, 2
      %s36 = scalar_select %p35, 0, %s34
      %s37 = sadd.s32 1, %s26
      %s38 = scalar_select %p35, %s37, %s26
      %p39 = scmp.ge.s32.totalorder %s38, 2
      %s40 = scalar_select %p39, 0, %s38
      %s41 = sadd.s32 1, %s25
      %s42 = scalar_select %p39, %s41, %s25
      %p43 = scmp.ge.s32.totalorder %s42, 4
      %s44 = scalar_select %p43, 0, %s42
      %s45 = ssub.s32 %s25, %s44
      %s46 = ssub.s32 %s27, %s36
      %s47 = sor.u32 %s45, %s46
      %p48 = scmp.eq.s32.totalorder %s47, 0
      %s50 = sadd.s32 %s49, 1
      %s51 = scalar_select %p48, %s49, %s50
      %p54 = pneg %p48
      %p55 = scmp.eq.s32.totalorder %s18, 15
      %p56 = por %p54, %p55
      %p57 = scmp.ne.s32.totalorder %s49, %s52
      %p58 = scmp.eq.s32.totalorder %s18, 0
      %p59 = por %p57, %p58
      %p60 = scmp.ne.s32.totalorder %s49, %s52
      %p61 = scmp.eq.s32.totalorder %s23, 15
      %p62 = por %p60, %p61
      %p63 = scmp.ne.s32.totalorder %s52, %s53
      %p64 = scmp.eq.s32.totalorder %s23, 0
      %p65 = por %p63, %p64
      %p66 = scmp.ne.s32.totalorder %s52, %s53
      %p67 = scmp.eq.s32.totalorder %s24, 15
      %p68 = por %p66, %p67
      %p70 = scmp.ne.s32.totalorder %s53, %s69
      %p71 = scmp.eq.s32.totalorder %s24, 0
      %p72 = por %p70, %p71
      %s73 = ssub.s32 %s27, %s36
      %s74 = ssub.s32 %s26, %s40
      %s75 = sor.u32 %s73, %s74
      %p76 = scmp.eq.s32.totalorder %s75, 0
      %s78 = sadd.s32 %s77, 1
      %s79 = scalar_select %p76, %s77, %s78
      %p82 = pneg %p76
      %p83 = scmp.eq.s32.totalorder %s18, 15
      %p84 = por %p82, %p83
      %p85 = scmp.ne.s32.totalorder %s77, %s80
      %p86 = scmp.eq.s32.totalorder %s18, 0
      %p87 = por %p85, %p86
      %p88 = scmp.ne.s32.totalorder %s77, %s80
      %p89 = scmp.eq.s32.totalorder %s23, 15
      %p90 = por %p88, %p89
      %p91 = scmp.ne.s32.totalorder %s80, %s81
      %p92 = scmp.eq.s32.totalorder %s23, 0
      %p93 = por %p91, %p92
      %p94 = scmp.ne.s32.totalorder %s80, %s81
      %p95 = scmp.eq.s32.totalorder %s24, 15
      %p96 = por %p94, %p95
      %p98 = scmp.ne.s32.totalorder %s81, %s97
      %p99 = scmp.eq.s32.totalorder %s24, 0
      %p100 = por %p98, %p99
      %s101 = ssub.s32 %s26, %s40
      %p102 = scmp.eq.s32.totalorder %s101, 0
      %s104 = sadd.s32 %s103, 1
      %s105 = scalar_select %p102, %s103, %s104
      %p108 = pneg %p102
      %p109 = scmp.eq.s32.totalorder %s18, 15
      %p110 = por %p108, %p109
      %p111 = scmp.ne.s32.totalorder %s103, %s106
      %p112 = scmp.eq.s32.totalorder %s18, 0
      %p113 = por %p111, %p112
      %p114 = scmp.ne.s32.totalorder %s103, %s106
      %p115 = scmp.eq.s32.totalorder %s23, 15
      %p116 = por %p114, %p115
      %p117 = scmp.ne.s32.totalorder %s106, %s107
      %p118 = scmp.eq.s32.totalorder %s23, 0
      %p119 = por %p117, %p118
      %p120 = scmp.ne.s32.totalorder %s106, %s107
      %p121 = scmp.eq.s32.totalorder %s24, 15
      %p122 = por %p120, %p121
      %p124 = scmp.ne.s32.totalorder %s107, %s123
      %p125 = scmp.eq.s32.totalorder %s24, 0
      %p126 = por %p124, %p125
      %s127 = ssub.s32 %s25, %s44
      %s128 = ssub.s32 %s26, %s40
      %s129 = sor.u32 %s127, %s128
      %p130 = scmp.eq.s32.totalorder %s129, 0
      %s132 = sadd.s32 %s131, 1
      %s133 = scalar_select %p130, %s131, %s132
      %p136 = pneg %p130
      %p137 = scmp.eq.s32.totalorder %s18, 15
      %p138 = por %p136, %p137
      %p139 = scmp.ne.s32.totalorder %s131, %s134
      %p140 = scmp.eq.s32.totalorder %s18, 0
      %p141 = por %p139, %p140
      %p142 = scmp.ne.s32.totalorder %s131, %s134
      %p143 = scmp.eq.s32.totalorder %s23, 15
      %p144 = por %p142, %p143
      %p145 = scmp.ne.s32.totalorder %s134, %s135
      %p146 = scmp.eq.s32.totalorder %s23, 0
      %p147 = por %p145, %p146
      %p148 = scmp.ne.s32.totalorder %s134, %s135
      %p149 = scmp.eq.s32.totalorder %s24, 15
      %p150 = por %p148, %p149
      %p152 = scmp.ne.s32.totalorder %s135, %s151
      %p153 = scmp.eq.s32.totalorder %s24, 0
      %p154 = por %p152, %p153
      %p155 = scmp.le.s32.totalorder 1, %s18
      %p156 = scmp.lt.s32.totalorder %s18, 17
      %p157 = pnand %p155, %p156
      %p158 = pneg %p157
      // Predicated region
      $region9: #{tpu_custom_call.1} parent=5 // pred_check
        _
      $region10: #{tpu_custom_call.1} parent=5 // pred_check_branch
        %160 = sbr.rel (%p157) target = $region12
      $region11: #{tpu_custom_call.1} parent=5 // pred_region
        %s161 = ssub.s32 %s18, 1
      $region12: #{tpu_custom_call.1} parent=5 // pred_fallthru
        _
      %p162 = scmp.lt.s32.totalorder %s18, 16
      // Predicated region
      $region13: #{tpu_custom_call.1} parent=5 // pred_check
        %p163 = pneg %p162
      $region14: #{tpu_custom_call.1} parent=5 // pred_check_branch
        %165 = sbr.rel (%p163) target = $region16
      $region15: #{tpu_custom_call.1} parent=5 // pred_region
        // Predicated region
        $region17: #{tpu_custom_call.1} parent=15 // pred_check
          %p166 = pneg %p59
        $region18: #{tpu_custom_call.1} parent=15 // pred_check_branch
          %168 = sbr.rel (%p166) target = $region20
        $region19: #{tpu_custom_call.1} parent=15 // pred_region
          %s169 = sand.u32 %s49, 1
          %s170 = scalar_lea.sflag [#allocation4], %s169
          %s171 = sand.u32 %s49, 1
          %s172 = smul.addr %s171, 64
          %s173 = scalar_lea.vmem [#allocation3], %s172
          %s174 = smul.u32 16, %s25
          %176 = vsyncadd %s170, 0
          %s177 = smul.addr %s174, 2
          %s178 = sadd.s32 %s27, %s177
          %s179 = smul.addr %s178, 4
          %s180 = scalar_lea.hbm %s0, %s179
          %s181 = sshll.u32 %s180, 4
          %s182 = int_to_ptr.hbm [resolvable:$true] %s181
          %s183 = sshll.u32 %s173, 4
          %s184 = int_to_ptr.vmem [resolvable:$true] %s183
          %189 = dma.hbm_to_vmem [thread:$0]  %s182, 1024, %s184, %s170, 128, 64, 4
        $region20: #{tpu_custom_call.1} parent=15 // pred_fallthru
          _
        // Predicated region
        $region21: #{tpu_custom_call.1} parent=15 // pred_check
          %p190 = pneg %p87
        $region22: #{tpu_custom_call.1} parent=15 // pred_check_branch
          %192 = sbr.rel (%p190) target = $region24
        $region23: #{tpu_custom_call.1} parent=15 // pred_region
          %s193 = sand.u32 %s18, 1
          %s194 = scalar_lea.sflag [#allocation7], %s193
          %s195 = sand.u32 %s77, 1
          %s196 = smul.addr %s195, 64
          %s197 = scalar_lea.vmem [#allocation6], %s196
          %s198 = smul.u32 16, %s27
          %200 = vsyncadd %s194, 0
          %s201 = smul.addr %s198, 2
          %s202 = sadd.s32 %s26, %s201
          %s203 = smul.addr %s202, 4
          %s204 = scalar_lea.hbm %s1, %s203
          %s205 = sshll.u32 %s204, 4
          %s206 = int_to_ptr.hbm [resolvable:$true] %s205
          %s207 = sshll.u32 %s197, 4
          %s208 = int_to_ptr.vmem [resolvable:$true] %s207
          %213 = dma.hbm_to_vmem [thread:$0]  %s206, 1024, %s208, %s194, 128, 64, 4
        $region24: #{tpu_custom_call.1} parent=15 // pred_fallthru
          _
        // Predicated region
        $region25: #{tpu_custom_call.1} parent=15 // pred_check
          %p214 = pneg %p113
        $region26: #{tpu_custom_call.1} parent=15 // pred_check_branch
          %216 = sbr.rel (%p214) target = $region28
        $region27: #{tpu_custom_call.1} parent=15 // pred_region
          %s217 = sand.u32 %s18, 1
          %s218 = scalar_lea.sflag [#allocation7], %s217
          %s219 = sand.u32 %s103, 1
          %s220 = scalar_lea.vmem [#allocation8], %s219
          %222 = vsyncadd %s218, 0
          %s223 = scalar_lea.hbm %s2, %s26
          %s225 = sshll.u32 %s223, 4
          %s226 = int_to_ptr.hbm [resolvable:$true] %s225
          %s227 = sshll.u32 %s220, 4
          %s228 = int_to_ptr.vmem [resolvable:$true] %s227
          %230 = dma.hbm_to_vmem [thread:$0]  %s226, 16, %s228, %s218
        $region28: #{tpu_custom_call.1} parent=15 // pred_fallthru
          _
      $region16: #{tpu_custom_call.1} parent=5 // pred_fallthru
        _
      %p231 = scmp.le.s32.totalorder 1, %s18
      %p232 = scmp.lt.s32.totalorder %s18, 17
      %p233 = pnand %p231, %p232
      %p234 = pneg %p233
      // Predicated region
      $region29: #{tpu_custom_call.1} parent=5 // pred_check
        _
      $region30: #{tpu_custom_call.1} parent=5 // pred_check_branch
        %236 = sbr.rel (%p233) target = $region32
      $region31: #{tpu_custom_call.1} parent=5 // pred_region
        %s237 = ssub.s32 %s18, 1
        %s238 = sand.u32 %s52, 1
        %s239 = scalar_lea.sflag [#allocation4], %s238
        %s240 = sand.u32 %s52, 1
        %s241 = smul.addr %s240, 64
        %s242 = scalar_lea.vmem [#allocation3], %s241
        // Predicated region
        $region33: #{tpu_custom_call.1} parent=31 // pred_check
          %p243 = pneg %p65
        $region34: #{tpu_custom_call.1} parent=31 // pred_check_branch
          %245 = sbr.rel (%p243) target = $region36
        $region35: #{tpu_custom_call.1} parent=31 // pred_region
          %247 = dma.done %s239, 1024
        $region36: #{tpu_custom_call.1} parent=31 // pred_fallthru
          _
        %s248 = sand.u32 %s23, 1
        %s249 = scalar_lea.sflag [#allocation7], %s248
        %s250 = sand.u32 %s80, 1
        %s251 = smul.addr %s250, 64
        %s252 = scalar_lea.vmem [#allocation6], %s251
        // Predicated region
        $region37: #{tpu_custom_call.1} parent=31 // pred_check
          %p253 = pneg %p93
        $region38: #{tpu_custom_call.1} parent=31 // pred_check_branch
          %255 = sbr.rel (%p253) target = $region40
        $region39: #{tpu_custom_call.1} parent=31 // pred_region
          %257 = dma.done %s249, 1024
        $region40: #{tpu_custom_call.1} parent=31 // pred_fallthru
          _
        %s258 = sand.u32 %s23, 1
        %s259 = scalar_lea.sflag [#allocation7], %s258
        %s260 = sand.u32 %s106, 1
        %s261 = scalar_lea.vmem [#allocation8], %s260
        // Predicated region
        $region41: #{tpu_custom_call.1} parent=31 // pred_check
          %p262 = pneg %p119
        $region42: #{tpu_custom_call.1} parent=31 // pred_check_branch
          %264 = sbr.rel (%p262) target = $region44
        $region43: #{tpu_custom_call.1} parent=31 // pred_region
          %266 = dma.done %s259, 16
        $region44: #{tpu_custom_call.1} parent=31 // pred_fallthru
          _
        %s267 = sand.u32 %s52, 1
        %s268 = scalar_lea.sflag [#allocation4], %s267
        %s269 = sand.u32 %s52, 1
        %s270 = smul.addr %s269, 64
        %s271 = scalar_lea.vmem [#allocation3], %s270
        %p272 = pneg %p65
        %p273 = pneg %p62
        %s274 = sand.u32 %s23, 1
        %s275 = scalar_lea.sflag [#allocation7], %s274
        %s276 = sand.u32 %s80, 1
        %s277 = smul.addr %s276, 64
        %s278 = scalar_lea.vmem [#allocation6], %s277
        %p279 = pneg %p93
        %p280 = pneg %p90
        %s281 = sand.u32 %s23, 1
        %s282 = scalar_lea.sflag [#allocation7], %s281
        %s283 = sand.u32 %s106, 1
        %s284 = scalar_lea.vmem [#allocation8], %s283
        %p285 = pneg %p119
        %p286 = pneg %p116
        %p287 = pneg %p147
        %p288 = pneg %p144
        %s289 = sand.u32 %s134, 1
        %s290 = scalar_lea.sflag [#allocation5], %s289
        %s291 = sand.u32 %s134, 1
        %s292 = smul.addr %s291, 64
        %s293 = scalar_lea.vmem [#allocation9], %s292
        %s294 = smul.u32 16, %s28
        %s295 = smul.u32 16, %s30
        %s296 = smul.u32 16, %s28
        %p297 = scmp.eq.s32.totalorder %s30, 0
        // Predicated region
        $region45: #{tpu_custom_call.1} parent=31 // pred_check
          %p298 = pneg %p297
        $region46: #{tpu_custom_call.1} parent=31 // pred_check_branch
          %300 = sbr.rel (%p298) target = $region48
        $region47: #{tpu_custom_call.1} parent=31 // pred_region
          %301 = vst [vmem:[#allocation2] sm:$0xff] 0.0
          %302 = vst [vmem:[#allocation2 + $0x8] sm:$0xff] 0.0
          %303 = vst [vmem:[#allocation2 + $0x10] sm:$0xff] 0.0
          %304 = vst [vmem:[#allocation2 + $0x18] sm:$0xff] 0.0
          %305 = vst [vmem:[#allocation2 + $0x20] sm:$0xff] 0.0
          %306 = vst [vmem:[#allocation2 + $0x28] sm:$0xff] 0.0
          %307 = vst [vmem:[#allocation2 + $0x30] sm:$0xff] 0.0
          %308 = vst [vmem:[#allocation2 + $0x38] sm:$0xff] 0.0
          %309 = vst [vmem:[#allocation2 + $0x40] sm:$0xff] 0.0
          %310 = vst [vmem:[#allocation2 + $0x48] sm:$0xff] 0.0
          %311 = vst [vmem:[#allocation2 + $0x50] sm:$0xff] 0.0
          %312 = vst [vmem:[#allocation2 + $0x58] sm:$0xff] 0.0
          %313 = vst [vmem:[#allocation2 + $0x60] sm:$0xff] 0.0
          %314 = vst [vmem:[#allocation2 + $0x68] sm:$0xff] 0.0
          %315 = vst [vmem:[#allocation2 + $0x70] sm:$0xff] 0.0
          %316 = vst [vmem:[#allocation2 + $0x78] sm:$0xff] 0.0
        $region48: #{tpu_custom_call.1} parent=31 // pred_fallthru
          _
        %v317 = vld [vmem:[#allocation2] sm:$0xff]
        %v318 = vld [vmem:[#allocation2 + $0x8] sm:$0xff]
        %v319 = vld [vmem:[#allocation2 + $0x10] sm:$0xff]
        %v320 = vld [vmem:[#allocation2 + $0x18] sm:$0xff]
        %v321 = vld [vmem:[#allocation2 + $0x20] sm:$0xff]
        %v322 = vld [vmem:[#allocation2 + $0x28] sm:$0xff]
        %v323 = vld [vmem:[#allocation2 + $0x30] sm:$0xff]
        %v324 = vld [vmem:[#allocation2 + $0x38] sm:$0xff]
        %v325 = vld [vmem:[#allocation2 + $0x40] sm:$0xff]
        %v326 = vld [vmem:[#allocation2 + $0x48] sm:$0xff]
        %v327 = vld [vmem:[#allocation2 + $0x50] sm:$0xff]
        %v328 = vld [vmem:[#allocation2 + $0x58] sm:$0xff]
        %v329 = vld [vmem:[#allocation2 + $0x60] sm:$0xff]
        %v330 = vld [vmem:[#allocation2 + $0x68] sm:$0xff]
        %v331 = vld [vmem:[#allocation2 + $0x70] sm:$0xff]
        %v332 = vld [vmem:[#allocation2 + $0x78] sm:$0xff]
        %v333 = vld [vmem:[%s242] sm:$0xf]
        %v334 = vld [vmem:[%s242 + $0x4] sm:$0xf]
        %v335 = vld [vmem:[%s242 + $0x8] sm:$0xf]
        %v336 = vld [vmem:[%s242 + $0xc] sm:$0xf]
        %v337 = vld [vmem:[%s242 + $0x10] sm:$0xf]
        %v338 = vld [vmem:[%s242 + $0x14] sm:$0xf]
        %v339 = vld [vmem:[%s242 + $0x18] sm:$0xf]
        %v340 = vld [vmem:[%s242 + $0x1c] sm:$0xf]
        %v341 = vld [vmem:[%s242 + $0x20] sm:$0xf]
        %v342 = vld [vmem:[%s242 + $0x24] sm:$0xf]
        %v343 = vld [vmem:[%s242 + $0x28] sm:$0xf]
        %v344 = vld [vmem:[%s242 + $0x2c] sm:$0xf]
        %v345 = vld [vmem:[%s242 + $0x30] sm:$0xf]
        %v346 = vld [vmem:[%s242 + $0x34] sm:$0xf]
        %v347 = vld [vmem:[%s242 + $0x38] sm:$0xf]
        %v348 = vld [vmem:[%s242 + $0x3c] sm:$0xf]
        %v349 = vld [vmem:[%s252] sm:$0xf]
        %v350 = vld [vmem:[%s252 + $0x4] sm:$0xf]
        %v351 = vld [vmem:[%s252 + $0x8] sm:$0xf]
        %v352 = vld [vmem:[%s252 + $0xc] sm:$0xf]
        %v353 = vld [vmem:[%s252 + $0x10] sm:$0xf]
        %v354 = vld [vmem:[%s252 + $0x14] sm:$0xf]
        %v355 = vld [vmem:[%s252 + $0x18] sm:$0xf]
        %v356 = vld [vmem:[%s252 + $0x1c] sm:$0xf]
        %v357 = vld [vmem:[%s252 + $0x20] sm:$0xf]
        %v358 = vld [vmem:[%s252 + $0x24] sm:$0xf]
        %v359 = vld [vmem:[%s252 + $0x28] sm:$0xf]
        %v360 = vld [vmem:[%s252 + $0x2c] sm:$0xf]
        %v361 = vld [vmem:[%s252 + $0x30] sm:$0xf]
        %v362 = vld [vmem:[%s252 + $0x34] sm:$0xf]
        %v363 = vld [vmem:[%s252 + $0x38] sm:$0xf]
        %v364 = vld [vmem:[%s252 + $0x3c] sm:$0xf]
        %v381 = vunpack.c.l.b16 %v333
        %v382 = vunpack.c.l.b16 %v334
        %v383 = vunpack.c.l.b16 %v335
        %v384 = vunpack.c.l.b16 %v336
        %v385 = vunpack.c.l.b16 %v337
        %v386 = vunpack.c.l.b16 %v338
        %v387 = vunpack.c.l.b16 %v339
        %v388 = vunpack.c.l.b16 %v340
        %v389 = vunpack.c.l.b16 %v341
        %v390 = vunpack.c.l.b16 %v342
        %v391 = vunpack.c.l.b16 %v343
        %v392 = vunpack.c.l.b16 %v344
        %v393 = vunpack.c.l.b16 %v345
        %v394 = vunpack.c.l.b16 %v346
        %v395 = vunpack.c.l.b16 %v347
        %v396 = vunpack.c.l.b16 %v348
        %v397 = vpack.c.b16 %v382, %v381
        %v398 = vpack.c.b16 %v384, %v383
        %v399 = vpack.c.b16 %v386, %v385
        %v400 = vpack.c.b16 %v388, %v387
        %v401 = vpack.c.b16 %v390, %v389
        %v402 = vpack.c.b16 %v392, %v391
        %v403 = vpack.c.b16 %v394, %v393
        %v404 = vpack.c.b16 %v396, %v395
        %v429 = vunpack.c.l.b16 %v349
        %v430 = vunpack.c.l.b16 %v350
        %v431 = vunpack.c.l.b16 %v351
        %v432 = vunpack.c.l.b16 %v352
        %v433 = vunpack.c.l.b16 %v353
        %v434 = vunpack.c.l.b16 %v354
        %v435 = vunpack.c.l.b16 %v355
        %v436 = vunpack.c.l.b16 %v356
        %v437 = vunpack.c.l.b16 %v357
        %v438 = vunpack.c.l.b16 %v358
        %v439 = vunpack.c.l.b16 %v359
        %v440 = vunpack.c.l.b16 %v360
        %v441 = vunpack.c.l.b16 %v361
        %v442 = vunpack.c.l.b16 %v362
        %v443 = vunpack.c.l.b16 %v363
        %v444 = vunpack.c.l.b16 %v364
        %v445 = vpack.c.b16 %v430, %v429
        %v446 = vpack.c.b16 %v432, %v431
        %v447 = vpack.c.b16 %v434, %v433
        %v448 = vpack.c.b16 %v436, %v435
        %v449 = vpack.c.b16 %v438, %v437
        %v450 = vpack.c.b16 %v440, %v439
        %v451 = vpack.c.b16 %v442, %v441
        %v452 = vpack.c.b16 %v444, %v443
        %461 = vmatpush.bf16.msra.mxu0 %v452
        %462 = vmatpush.bf16.msra.mxu0 %v451
        %463 = vmatpush.bf16.msra.mxu0 %v450
        %464 = vmatpush.bf16.msra.mxu0 %v449
        %465 = vmatpush.bf16.msra.mxu0 %v448
        %466 = vmatpush.bf16.msra.mxu0 %v447
        %467 = vmatpush.bf16.msra.mxu0 %v446
        %468 = vmatpush.bf16.msra.mxu0 %v445
        %469 = vmatmul.bf16.gmra.mxu0 %v397
        %v470 = vpop.f32.mrf.mxu0
        %v471 = vadd.f32 0.0, %v470
        %v472 = vpop.f32.mrf.mxu0
        %v473 = vadd.f32 0.0, %v472
        %474 = vmatmul.bf16.gmra.mxu0 %v398
        %v475 = vpop.f32.mrf.mxu0
        %v476 = vadd.f32 0.0, %v475
        %v477 = vpop.f32.mrf.mxu0
        %v478 = vadd.f32 0.0, %v477
        %479 = vmatmul.bf16.gmra.mxu0 %v399
        %v480 = vpop.f32.mrf.mxu0
        %v481 = vadd.f32 0.0, %v480
        %v482 = vpop.f32.mrf.mxu0
        %v483 = vadd.f32 0.0, %v482
        %484 = vmatmul.bf16.gmra.mxu0 %v400
        %v485 = vpop.f32.mrf.mxu0
        %v486 = vadd.f32 0.0, %v485
        %v487 = vpop.f32.mrf.mxu0
        %v488 = vadd.f32 0.0, %v487
        %489 = vmatmul.bf16.gmra.mxu0 %v401
        %v490 = vpop.f32.mrf.mxu0
        %v491 = vadd.f32 0.0, %v490
        %v492 = vpop.f32.mrf.mxu0
        %v493 = vadd.f32 0.0, %v492
        %494 = vmatmul.bf16.gmra.mxu0 %v402
        %v495 = vpop.f32.mrf.mxu0
        %v496 = vadd.f32 0.0, %v495
        %v497 = vpop.f32.mrf.mxu0
        %v498 = vadd.f32 0.0, %v497
        %499 = vmatmul.bf16.gmra.mxu0 %v403
        %v500 = vpop.f32.mrf.mxu0
        %v501 = vadd.f32 0.0, %v500
        %v502 = vpop.f32.mrf.mxu0
        %v503 = vadd.f32 0.0, %v502
        %504 = vmatmul.bf16.gmra.mxu0 %v404
        %v505 = vpop.f32.mrf.mxu0
        %v506 = vadd.f32 0.0, %v505
        %v507 = vpop.f32.mrf.mxu0
        %v508 = vadd.f32 0.0, %v507
        %509 = vdwg.mxu0
        %v510 = vadd.f32 %v317, %v471
        %v511 = vadd.f32 %v318, %v473
        %v512 = vadd.f32 %v319, %v476
        %v513 = vadd.f32 %v320, %v478
        %v514 = vadd.f32 %v321, %v481
        %v515 = vadd.f32 %v322, %v483
        %v516 = vadd.f32 %v323, %v486
        %v517 = vadd.f32 %v324, %v488
        %v518 = vadd.f32 %v325, %v491
        %v519 = vadd.f32 %v326, %v493
        %v520 = vadd.f32 %v327, %v496
        %v521 = vadd.f32 %v328, %v498
        %v522 = vadd.f32 %v329, %v501
        %v523 = vadd.f32 %v330, %v503
        %v524 = vadd.f32 %v331, %v506
        %v525 = vadd.f32 %v332, %v508
        %526 = vst [vmem:[#allocation2] sm:$0xff] %v510
        %527 = vst [vmem:[#allocation2 + $0x8] sm:$0xff] %v511
        %528 = vst [vmem:[#allocation2 + $0x10] sm:$0xff] %v512
        %529 = vst [vmem:[#allocation2 + $0x18] sm:$0xff] %v513
        %530 = vst [vmem:[#allocation2 + $0x20] sm:$0xff] %v514
        %531 = vst [vmem:[#allocation2 + $0x28] sm:$0xff] %v515
        %532 = vst [vmem:[#allocation2 + $0x30] sm:$0xff] %v516
        %533 = vst [vmem:[#allocation2 + $0x38] sm:$0xff] %v517
        %534 = vst [vmem:[#allocation2 + $0x40] sm:$0xff] %v518
        %535 = vst [vmem:[#allocation2 + $0x48] sm:$0xff] %v519
        %536 = vst [vmem:[#allocation2 + $0x50] sm:$0xff] %v520
        %537 = vst [vmem:[#allocation2 + $0x58] sm:$0xff] %v521
        %538 = vst [vmem:[#allocation2 + $0x60] sm:$0xff] %v522
        %539 = vst [vmem:[#allocation2 + $0x68] sm:$0xff] %v523
        %540 = vst [vmem:[#allocation2 + $0x70] sm:$0xff] %v524
        %541 = vst [vmem:[#allocation2 + $0x78] sm:$0xff] %v525
        %p542 = scmp.eq.s32.totalorder %s30, 1
        // Predicated region
        $region49: #{tpu_custom_call.1} parent=31 // pred_check
          %p543 = pneg %p542
        $region50: #{tpu_custom_call.1} parent=31 // pred_check_branch
          %545 = sbr.rel (%p543) target = $region52
        $region51: #{tpu_custom_call.1} parent=31 // pred_region
          %v546 = vld [vmem:[#allocation2] sm:$0xff]
          %v547 = vld [vmem:[#allocation2 + $0x8] sm:$0xff]
          %v548 = vld [vmem:[#allocation2 + $0x10] sm:$0xff]
          %v549 = vld [vmem:[#allocation2 + $0x18] sm:$0xff]
          %v550 = vld [vmem:[#allocation2 + $0x20] sm:$0xff]
          %v551 = vld [vmem:[#allocation2 + $0x28] sm:$0xff]
          %v552 = vld [vmem:[#allocation2 + $0x30] sm:$0xff]
          %v553 = vld [vmem:[#allocation2 + $0x38] sm:$0xff]
          %v554 = vld [vmem:[#allocation2 + $0x40] sm:$0xff]
          %v555 = vld [vmem:[#allocation2 + $0x48] sm:$0xff]
          %v556 = vld [vmem:[#allocation2 + $0x50] sm:$0xff]
          %v557 = vld [vmem:[#allocation2 + $0x58] sm:$0xff]
          %v558 = vld [vmem:[#allocation2 + $0x60] sm:$0xff]
          %v559 = vld [vmem:[#allocation2 + $0x68] sm:$0xff]
          %v560 = vld [vmem:[#allocation2 + $0x70] sm:$0xff]
          %v561 = vld [vmem:[#allocation2 + $0x78] sm:$0xff]
          %v562 = vld [vmem:[%s261] sm:$0x1]
          %v564 = vperm.slane %v562, 0
          %v566 = vadd.f32 %v546, %v564
          %v567 = vadd.f32 %v547, %v564
          %v568 = vadd.f32 %v548, %v564
          %v569 = vadd.f32 %v549, %v564
          %v570 = vadd.f32 %v550, %v564
          %v571 = vadd.f32 %v551, %v564
          %v572 = vadd.f32 %v552, %v564
          %v573 = vadd.f32 %v553, %v564
          %v574 = vadd.f32 %v554, %v564
          %v575 = vadd.f32 %v555, %v564
          %v576 = vadd.f32 %v556, %v564
          %v577 = vadd.f32 %v557, %v564
          %v578 = vadd.f32 %v558, %v564
          %v579 = vadd.f32 %v559, %v564
          %v580 = vadd.f32 %v560, %v564
          %v581 = vadd.f32 %v561, %v564
          %v582 = vtanh.pop %v566
          %v583 = vtanh.pop %v567
          %v584 = vtanh.pop %v568
          %v585 = vtanh.pop %v569
          %v586 = vtanh.pop %v570
          %v587 = vtanh.pop %v571
          %v588 = vtanh.pop %v572
          %v589 = vtanh.pop %v573
          %v590 = vtanh.pop %v574
          %v591 = vtanh.pop %v575
          %v592 = vtanh.pop %v576
          %v593 = vtanh.pop %v577
          %v594 = vtanh.pop %v578
          %v595 = vtanh.pop %v579
          %v596 = vtanh.pop %v580
          %v597 = vtanh.pop %v581
          %v598 = vpack.c.bf16 %v582, %v582
          %v599 = vpack.c.bf16 %v583, %v583
          %v600 = vpack.c.bf16 %v584, %v584
          %v601 = vpack.c.bf16 %v585, %v585
          %v602 = vpack.c.bf16 %v586, %v586
          %v603 = vpack.c.bf16 %v587, %v587
          %v604 = vpack.c.bf16 %v588, %v588
          %v605 = vpack.c.bf16 %v589, %v589
          %v606 = vpack.c.bf16 %v590, %v590
          %v607 = vpack.c.bf16 %v591, %v591
          %v608 = vpack.c.bf16 %v592, %v592
          %v609 = vpack.c.bf16 %v593, %v593
          %v610 = vpack.c.bf16 %v594, %v594
          %v611 = vpack.c.bf16 %v595, %v595
          %v612 = vpack.c.bf16 %v596, %v596
          %v613 = vpack.c.bf16 %v597, %v597
          %614 = vst [vmem:[%s293] sm:$0xf] %v598
          %615 = vst [vmem:[%s293 + $0x4] sm:$0xf] %v599
          %616 = vst [vmem:[%s293 + $0x8] sm:$0xf] %v600
          %617 = vst [vmem:[%s293 + $0xc] sm:$0xf] %v601
          %618 = vst [vmem:[%s293 + $0x10] sm:$0xf] %v602
          %619 = vst [vmem:[%s293 + $0x14] sm:$0xf] %v603
          %620 = vst [vmem:[%s293 + $0x18] sm:$0xf] %v604
          %621 = vst [vmem:[%s293 + $0x1c] sm:$0xf] %v605
          %622 = vst [vmem:[%s293 + $0x20] sm:$0xf] %v606
          %623 = vst [vmem:[%s293 + $0x24] sm:$0xf] %v607
          %624 = vst [vmem:[%s293 + $0x28] sm:$0xf] %v608
          %625 = vst [vmem:[%s293 + $0x2c] sm:$0xf] %v609
          %626 = vst [vmem:[%s293 + $0x30] sm:$0xf] %v610
          %627 = vst [vmem:[%s293 + $0x34] sm:$0xf] %v611
          %628 = vst [vmem:[%s293 + $0x38] sm:$0xf] %v612
          %629 = vst [vmem:[%s293 + $0x3c] sm:$0xf] %v613
        $region52: #{tpu_custom_call.1} parent=31 // pred_fallthru
          _
        %s630 = sand.u32 %s134, 1
        %s631 = scalar_lea.sflag [#allocation5], %s630
        %s632 = sand.u32 %s134, 1
        %s633 = smul.addr %s632, 64
        %s634 = scalar_lea.vmem [#allocation9], %s633
        // Predicated region
        $region53: #{tpu_custom_call.1} parent=31 // pred_check
          %p635 = pneg %p144
        $region54: #{tpu_custom_call.1} parent=31 // pred_check_branch
          %637 = sbr.rel (%p635) target = $region56
        $region55: #{tpu_custom_call.1} parent=31 // pred_region
          %s638 = smul.u32 16, %s28
          %640 = vsyncadd %s631, 0
          %s641 = smul.addr %s638, 2
          %s642 = sadd.s32 %s29, %s641
          %s643 = smul.addr %s642, 4
          %s644 = scalar_lea.hbm %s3, %s643
          %s645 = sshll.u32 %s634, 4
          %s646 = int_to_ptr.vmem [resolvable:$true] %s645
          %s647 = sshll.u32 %s644, 4
          %s648 = int_to_ptr.hbm [resolvable:$true] %s647
          %653 = dma.vmem_to_hbm [thread:$0]  %s646, 1024, %s648, %s631, 64, 128, 4
        $region56: #{tpu_custom_call.1} parent=31 // pred_fallthru
          _
      $region32: #{tpu_custom_call.1} parent=5 // pred_fallthru
        _
      %p654 = scmp.le.s32.totalorder 2, %s18
      // Predicated region
      $region57: #{tpu_custom_call.1} parent=5 // pred_check
        %p655 = pneg %p654
      $region58: #{tpu_custom_call.1} parent=5 // pred_check_branch
        %657 = sbr.rel (%p655) target = $region60
      $region59: #{tpu_custom_call.1} parent=5 // pred_region
        %s658 = ssub.s32 %s18, 2
        // Predicated region
        $region61: #{tpu_custom_call.1} parent=59 // pred_check
          %p659 = pneg %p150
        $region62: #{tpu_custom_call.1} parent=59 // pred_check_branch
          %661 = sbr.rel (%p659) target = $region64
        $region63: #{tpu_custom_call.1} parent=59 // pred_region
          %s662 = sand.u32 %s135, 1
          %s663 = scalar_lea.sflag [#allocation5], %s662
          %s664 = sand.u32 %s135, 1
          %s665 = smul.addr %s664, 64
          %s666 = scalar_lea.vmem [#allocation9], %s665
          %668 = dma.done %s663, 1024
        $region64: #{tpu_custom_call.1} parent=59 // pred_fallthru
          _
      $region60: #{tpu_custom_call.1} parent=5 // pred_fallthru
        _
    $region6: #{tpu_custom_call.1} parent=1 // loop_footer
      %s22 = sadd.s32 1, %s18
    $region7: #{tpu_custom_call.1} parent=1 // loop_footer_branch
      %17 = sbr.rel target = $region3
    $region8: #{tpu_custom_call.1} parent=1 // loop_exit
      _
    %669 = vsyncpa [#allocation4], 1
    %s670 = scalar_lea.sflag [#allocation4], 1
    %671 = vsyncpa %s670, 1
    %672 = vsyncpa [#allocation7], 1
    %s673 = scalar_lea.sflag [#allocation7], 1
    %674 = vsyncpa %s673, 1
    %675 = vsyncpa [#allocation5], 1
    %s676 = scalar_lea.sflag [#allocation5], 1
    %677 = vsyncpa %s676, 1

</llo_original>
